<compile_context>
chip_gen: v5e
topology: v5e:2x2
jax: 0.10.0
libtpu: 0.0.40
codegen_flags: <defaults>
</compile_context>

<pallas_src>
import jax
import jax.numpy as jnp
import numpy as np
from jax.experimental import pallas as pl
from jax.experimental.pallas import tpu as pltpu


# ---------------------------------------------------------------------------
# Path 1: true identity — output aliases input, zero data movement.
# ---------------------------------------------------------------------------
def _noop_kernel(x_hbm_ref, o_hbm_ref):
    # The output buffer IS the input buffer (input_output_aliases={0: 0});
    # there is nothing to compute or move.
    del x_hbm_ref, o_hbm_ref


def identity_augmenter_forward(batch: jax.Array) -> jax.Array:
    """Pallas IdentityAugmenter.forward: returns `batch` unchanged, zero-copy."""
    return pl.pallas_call(
        _noop_kernel,
        out_shape=jax.ShapeDtypeStruct(batch.shape, batch.dtype),
        in_specs=[pl.BlockSpec(memory_space=pl.ANY)],   # raw HBM ref, no auto-DMA
        out_specs=pl.BlockSpec(memory_space=pl.ANY),
        input_output_aliases={0: 0},                    # output aliases input
    )(batch)


# ---------------------------------------------------------------------------
# Path 2: materialized copy at HBM roofline (lane-dense, tiled, pipelined).
# ---------------------------------------------------------------------------
_LANE = 1024          # lane axis: large multiple of 128 -> unmasked full-width vst
_MAX_TILE_ROWS = 512  # 512 x 1024 x 4B = 2 MiB/tile; x4 (in+out, double-buffered)
                      # = 8 MiB VMEM, inside the 16 MiB v5e scoped default.
_ROW_ALIGN = 32       # multiple of sublane packing for f32(8)/bf16(16)/int8(32)


def _copy_kernel(x_ref, o_ref):
    o_ref[...] = x_ref[...]


def _round_up(x: int, m: int) -> int:
    return ((x + m - 1) // m) * m


def identity_copy_pallas(batch: jax.Array) -> jax.Array:
    """Identity that produces a *new* buffer via a tiled, pipelined Pallas copy."""
    shape, dtype = batch.shape, batch.dtype
    total = int(np.prod(shape)) if len(shape) > 0 else 1
    if total == 0:
        return batch

    # Glue: flatten to a lane-dense (rows, _LANE) slab; pad the tail so every
    # block is full-width (no masked vst, no (8,128) divisibility violations,
    # layout-clean for packed sub-32-bit dtypes).
    n_rows = pl.cdiv(total, _LANE)
    tile_rows = min(_MAX_TILE_ROWS, _round_up(n_rows, _ROW_ALIGN))
    n_rows_pad = _round_up(n_rows, tile_rows)
    padded_total = n_rows_pad * _LANE

    flat = batch.reshape(-1)
    if padded_total != total:
        flat = jnp.pad(flat, (0, padded_total - total))
    x2d = flat.reshape(n_rows_pad, _LANE)

    out2d = pl.pallas_call(
        _copy_kernel,
        out_shape=jax.ShapeDtypeStruct((n_rows_pad, _LANE), dtype),
        grid=(n_rows_pad // tile_rows,),
        in_specs=[pl.BlockSpec((tile_rows, _LANE), lambda i: (i, 0))],
        out_specs=pl.BlockSpec((tile_rows, _LANE), lambda i: (i, 0)),
        compiler_params=pltpu.CompilerParams(
            dimension_semantics=("parallel",),   # shard tile loop across TCs (v7x)
        ),
    )(x2d)

    return out2d.reshape(-1)[:total].reshape(shape)


def augment_and_collate(samples):
    """Equivalent of th.stack(samples, dim=0) — pure glue, not a hot path."""
    return jnp.stack(samples, axis=0)


if __name__ == "__main__":
    key = jax.random.PRNGKey(0)
    # Small NCHW batch consistent with a typical image augmenter input.
    x = jax.random.normal(key, (2, 4, 16, 16), dtype=jnp.float32)

    # Zero-copy forward path.
    y = jax.block_until_ready(identity_augmenter_forward(x))
    assert y.shape == x.shape and y.dtype == x.dtype
    assert bool(jnp.array_equal(y, x))

    # Materialized-copy path (distinct buffer), f32.
    y2 = jax.block_until_ready(identity_copy_pallas(x))
    assert y2.shape == x.shape and y2.dtype == x.dtype
    assert bool(jnp.array_equal(y2, x))

    # Materialized-copy path also works for a packed dtype (bf16).
    xb = x.astype(jnp.bfloat16)
    y3 = jax.block_until_ready(identity_copy_pallas(xb))
    assert y3.shape == xb.shape and y3.dtype == xb.dtype
    assert bool(jnp.array_equal(y3, xb))

    # augment_and_collate (stacking individual samples).
    samples = [x[i] for i in range(x.shape[0])]
    stacked = jax.block_until_ready(augment_and_collate(samples))
    assert stacked.shape == x.shape
    assert bool(jnp.array_equal(stacked, x))

    print("KERNEL_OK")
</pallas_src>

<mosaic_0001>
module attributes {stable_mosaic.version = 11 : i64} {
  func.func @_noop_kernel(%arg0: memref<2x4x16x16xf32, #tpu.memory_space<any>>, %arg1: memref<2x4x16x16xf32, #tpu.memory_space<any>>) attributes {dimension_semantics = [], scalar_prefetch = 0 : i64, scratch_operands = 0 : i64, tpu.core_type = #tpu.core_type<tc>} {
    return
  }
}

</mosaic_0001>

<llo_original>
// kernel: tpu_custom_call.1
$region0: #{tpu_custom_call.1}
  #allocation0 [shape = 'u32[]', space=smem, size = 0x4, offset = 0x4, fixed_abs, tag = 'smem constant byte address 0x4 - core index']
  #allocation1 [shape = 'u32[72,128]{1,0:T(1,128)}', space=vmem, size = 0x9000, scoped, tag = 'internal scratch']
  %s0 = inlined_call_operand.hbm [shape: f32[2,4,16,16], index: 0, kind: input, shape index: {}, may-alias: {0,1}]
  %s1 = inlined_call_operand.hbm [shape: f32[2,4,16,16], index: 1, kind: output, shape index: {}, may-alias: {0,1}]
  %s2 = sld [smem:[#allocation0]]
  $region2: #{tpu_custom_call.1} parent=0
    _
  %s4 = ssub.s32 1, %s2
  %s5 = scalar_select 0, %s4, %s2

</llo_original>
